<compile_context>
chip_gen: v6e
topology: v6e:2x2x1
jax: 0.10.0
libtpu: 0.0.40
codegen_flags: <defaults>
</compile_context>

<pallas_src>
import jax
import jax.numpy as jnp
from jax.experimental import pallas as pl
from jax.experimental.pallas import tpu as pltpu


def _outconv_kernel(x_ref, w_ref, b_ref, o_ref):
    # x_ref: (Cin, tm), w_ref: (Cout, Cin), b_ref: (Cout, 1), o_ref: (Cout, tm)
    acc = jnp.dot(w_ref[...], x_ref[...], preferred_element_type=jnp.float32)
    o_ref[...] = (acc + b_ref[...]).astype(o_ref.dtype)


def _pick_tile(M):
    """Largest lane-dense row tile that still gives >=2 grid steps when possible."""
    m128 = ((M + 127) // 128) * 128  # M rounded up to a lane multiple
    for tm in (4096, 2048, 1024, 512, 256, 128):
        if m128 >= 2 * tm:
            return tm
    return m128  # tiny problem: single 128-aligned block


def out_conv(x, weight, bias):
    """1x1 conv forward.

    x:      (N, Cin, H, W)  float32
    weight: (Cout, Cin, 1, 1)
    bias:   (Cout,)
    returns (N, Cout, H, W)
    """
    N, Cin, H, W = x.shape
    Cout = weight.shape[0]
    M = N * H * W

    # Cheap leading-axis reorg: NCHW -> (Cin, N, H, W) -> (Cin, M)
    x2 = jnp.transpose(x, (1, 0, 2, 3)).reshape(Cin, M)
    w2 = weight.reshape(Cout, Cin)          # (Cout, Cin)
    b2 = bias.reshape(Cout, 1)              # (Cout, 1) — broadcast along lanes

    # Row tile over M; pad M to a multiple of tm so every block is aligned
    # and fully pipelined (pad rows are throwaway bandwidth, < 1 tile).
    tm = _pick_tile(M)
    M_pad = ((M + tm - 1) // tm) * tm
    if M_pad != M:
        x2 = jnp.pad(x2, ((0, 0), (0, M_pad - M)))

    grid = (M_pad // tm,)

    # Purely HBM-bandwidth bound (Cin=4, Cout=3 -> negligible FLOPs).
    cost = pl.CostEstimate(
        flops=2 * M * Cin * Cout,
        transcendentals=0,
        bytes_accessed=4 * (M * Cin + M * Cout + Cin * Cout + Cout),
    )

    out2 = pl.pallas_call(
        _outconv_kernel,
        out_shape=jax.ShapeDtypeStruct((Cout, M_pad), x.dtype),
        grid=grid,
        in_specs=[
            pl.BlockSpec((Cin, tm), lambda i: (0, i)),    # lane-dense input tile
            pl.BlockSpec((Cout, Cin), lambda i: (0, 0)),  # whole weight, resident
            pl.BlockSpec((Cout, 1), lambda i: (0, 0)),    # bias, resident
        ],
        out_specs=pl.BlockSpec((Cout, tm), lambda i: (0, i)),  # lane-dense output
        compiler_params=pltpu.CompilerParams(
            dimension_semantics=("parallel",),
            # Per-step footprint is tiny (tm*(Cin+Cout)*4B double-buffered);
            # keep an explicit, conservative cap that also fits v7x's 64 MiB VMEM.
            vmem_limit_bytes=32 * 1024 * 1024,
        ),
        cost_estimate=cost,
    )(x2, w2, b2)

    # (Cout, M_pad) -> (Cout, M) -> (Cout, N, H, W) -> (N, Cout, H, W)
    out2 = out2[:, :M].reshape(Cout, N, H, W)
    return jnp.transpose(out2, (1, 0, 2, 3))


def init_params(key, in_channels, out_channels):
    """Deterministic synthetic init mimicking nn.Conv2d default shapes."""
    kw, kb = jax.random.split(key)
    fan_in = in_channels  # kernel_size=1
    bound = 1.0 / jnp.sqrt(fan_in)
    weight = jax.random.uniform(
        kw, (out_channels, in_channels, 1, 1), jnp.float32, -bound, bound)
    bias = jax.random.uniform(
        kb, (out_channels,), jnp.float32, -bound, bound)
    return weight, bias


if __name__ == "__main__":
    key = jax.random.PRNGKey(0)
    k_x, k_p = jax.random.split(key)

    N, Cin, H, W = 2, 4, 16, 16
    Cout = 3

    x = jax.random.normal(k_x, (N, Cin, H, W), jnp.float32)
    weight, bias = init_params(k_p, Cin, Cout)

    out = out_conv(x, weight, bias)
    out = jax.block_until_ready(out)

    # Reference check in plain JAX (1x1 conv == channel matmul + bias)
    ref = jnp.einsum("nchw,oc->nohw", x, weight.reshape(Cout, Cin)) \
        + bias.reshape(1, Cout, 1, 1)
    assert out.shape == (N, Cout, H, W)
    assert jnp.allclose(out, ref, atol=1e-5, rtol=1e-5)

    print("KERNEL_OK")
</pallas_src>

<mosaic_0001>
module attributes {stable_mosaic.version = 11 : i64} {
  func.func @_outconv_kernel(%arg0: i32, %arg1: memref<4x256xf32, #tpu.memory_space<vmem>>, %arg2: memref<3x4xf32, #tpu.memory_space<vmem>>, %arg3: memref<3x1xf32, #tpu.memory_space<vmem>>, %arg4: memref<3x256xf32, #tpu.memory_space<vmem>>) attributes {dimension_semantics = [#tpu.dimension_semantics<parallel>], iteration_bounds = array<i64: 2>, scalar_prefetch = 0 : i64, scratch_operands = 0 : i64, tpu.core_type = #tpu.core_type<tc>, window_params = [{transform_indices = @transform_0, window_bounds = array<i64: 4, 256>}, {pipeline_mode = #tpu.pipeline_mode<synchronous>, transform_indices = @transform_1, window_bounds = array<i64: 3, 4>}, {pipeline_mode = #tpu.pipeline_mode<synchronous>, transform_indices = @transform_2, window_bounds = array<i64: 3, 1>}, {transform_indices = @transform_3, window_bounds = array<i64: 3, 256>}]} {
    %c0 = arith.constant 0 : index
    %c0_0 = arith.constant 0 : index
    %0 = vector.load %arg2[%c0, %c0_0] : memref<3x4xf32, #tpu.memory_space<vmem>>, vector<3x4xf32>
    %c0_1 = arith.constant 0 : index
    %c0_2 = arith.constant 0 : index
    %1 = vector.load %arg1[%c0_1, %c0_2] : memref<4x256xf32, #tpu.memory_space<vmem>>, vector<4x256xf32>
    %cst = arith.constant dense<0.000000e+00> : vector<3x256xf32>
    %2 = tpu.matmul %0, %1, %cst {dimension_numbers = #tpu.dot_dimension_numbers<[1], [0], [0], [1], [0, 0, 1, 1], [], []>} : vector<3x4xf32>, vector<4x256xf32>, vector<3x256xf32> -> vector<3x256xf32>
    %c0_3 = arith.constant 0 : index
    %c0_4 = arith.constant 0 : index
    %3 = vector.load %arg3[%c0_3, %c0_4] : memref<3x1xf32, #tpu.memory_space<vmem>>, vector<3x1xf32>
    %4 = vector.broadcast %3 : vector<3x1xf32> to vector<3x256xf32>
    %5 = arith.addf %2, %4 : vector<3x256xf32>
    %c0_5 = arith.constant 0 : index
    %c0_6 = arith.constant 0 : index
    %6 = vector.load %arg4[%c0_5, %c0_6] : memref<3x256xf32, #tpu.memory_space<vmem>>, vector<3x256xf32>
    tpu.vector_store %arg4[%c0_5, %c0_6], %5 {strides = array<i32>} : memref<3x256xf32, #tpu.memory_space<vmem>>, vector<3x256xf32>,
    return
  }
  func.func @transform_0(%arg0: i32) -> (i32, i32) {
    %c0_i32 = arith.constant 0 : i32
    %c0_i32_0 = arith.constant 0 : i32
    return %c0_i32, %arg0 : i32, i32
  }
  func.func @transform_1(%arg0: i32) -> (i32, i32) {
    %c0_i32 = arith.constant 0 : i32
    %c0_i32_0 = arith.constant 0 : i32
    %c0_i32_1 = arith.constant 0 : i32
    return %c0_i32, %c0_i32_0 : i32, i32
  }
  func.func @transform_2(%arg0: i32) -> (i32, i32) {
    %c0_i32 = arith.constant 0 : i32
    %c0_i32_0 = arith.constant 0 : i32
    %c0_i32_1 = arith.constant 0 : i32
    return %c0_i32, %c0_i32_0 : i32, i32
  }
  func.func @transform_3(%arg0: i32) -> (i32, i32) {
    %c0_i32 = arith.constant 0 : i32
    %c0_i32_0 = arith.constant 0 : i32
    return %c0_i32, %arg0 : i32, i32
  }
}

</mosaic_0001>

<llo_original>
// kernel: tpu_custom_call.1
$region0: #{tpu_custom_call.1}
  #allocation0 [shape = 'u32[]', space=smem, size = 0x4, offset = 0x4, fixed_abs, tag = 'smem constant byte address 0x4 - core index']
  #allocation1 [shape = 'u32[144,128]{1,0:T(1,128)}', space=vmem, size = 0x12000, scoped, tag = 'internal scratch']
  %s0 = inlined_call_operand.hbm [shape: f32[4,512], index: 0, kind: input, shape index: {}]
  %s1 = inlined_call_operand.vmem [shape: f32[3,4], index: 1, kind: input, shape index: {}]
  %s2 = inlined_call_operand.vmem [shape: f32[3,1], index: 2, kind: input, shape index: {}]
  %s3 = inlined_call_operand.hbm [shape: f32[3,512], index: 3, kind: output, shape index: {}]
  %s4 = sld [smem:[#allocation0]]
  $region49: #{tpu_custom_call.1} parent=0
    _
  %s6 = ssub.s32 1, %s4
  %s7 = scalar_select 0, %s6, %s4
  $region1: #{tpu_custom_call.1} parent=0
    #allocation2 [shape = 'u8[8192]{0}', space=vmem, size = 0x2000, scoped, tag = 'input window, operand 0']
    #allocation3 [shape = 's32[2]{0}', space=sflag, size = 0x8, scoped, tag = 'scoped memory for tpu_custom_call.1']
    #allocation4 [shape = 's32[2]{0}', space=sflag, size = 0x8, scoped, tag = 'scoped memory for tpu_custom_call.1']
    #allocation5 [shape = 'u8[8192]{0}', space=vmem, size = 0x2000, scoped, tag = 'output window, operand 0']
    %8 = vsyncpa [#allocation3], 0
    %s9 = scalar_lea.sflag [#allocation3], 1
    %10 = vsyncpa %s9, 0
    %11 = vsyncpa [#allocation4], 0
    %s12 = scalar_lea.sflag [#allocation4], 1
    %13 = vsyncpa %s12, 0
    loop: start=0, step=1, limit=4
    $region2: #{tpu_custom_call.1} parent=1 // loop_pre_header
      _
    $region3: #{tpu_custom_call.1} parent=1 // loop_header
      %s15 = sphi 0, %s19
      %p16 = scmp.ge.s32.totalorder %s15, 4
      %s25 = sphi 0, %s27
      %s28 = sphi 0, %s25
      %s29 = sphi 0, %s28
      %s45 = sphi 0, %s29
      %s49 = sphi 0, %s49
      %s51 = sphi 0, %s49
      %s52 = sphi 0, %s51
      %s66 = sphi 0, %s52
      %s70 = sphi 0, %s70
      %s72 = sphi 0, %s70
      %s73 = sphi 0, %s72
      %s87 = sphi 0, %s73
      %s93 = sphi 0, %s95
      %s96 = sphi 0, %s93
      %s97 = sphi 0, %s96
      %s113 = sphi 0, %s97
    $region4: #{tpu_custom_call.1} parent=1 // loop_header_branch
      %18 = sbr.rel (%p16) target = $region8
    $region5: #{tpu_custom_call.1} parent=1 // loop_body
      %s20 = ssub.s32 %s15, 1
      %s21 = ssub.s32 %s15, 2
      %s22 = sadd.s32 %s15, 1
      %s23 = ssub.s32 %s15, %s22
      %p24 = scmp.eq.s32.totalorder %s23, 0
      %s26 = sadd.s32 %s25, 1
      %s27 = scalar_select %p24, %s25, %s26
      %p30 = pneg %p24
      %p31 = scmp.eq.s32.totalorder %s15, 1
      %p32 = por %p30, %p31
      %p33 = scmp.ne.s32.totalorder %s25, %s28
      %p34 = scmp.eq.s32.totalorder %s15, 0
      %p35 = por %p33, %p34
      %p36 = scmp.ne.s32.totalorder %s25, %s28
      %p37 = scmp.eq.s32.totalorder %s20, 1
      %p38 = por %p36, %p37
      %p39 = scmp.ne.s32.totalorder %s28, %s29
      %p40 = scmp.eq.s32.totalorder %s20, 0
      %p41 = por %p39, %p40
      %p42 = scmp.ne.s32.totalorder %s28, %s29
      %p43 = scmp.eq.s32.totalorder %s21, 1
      %p44 = por %p42, %p43
      %p46 = scmp.ne.s32.totalorder %s29, %s45
      %p47 = scmp.eq.s32.totalorder %s21, 0
      %p48 = por %p46, %p47
      %s50 = sadd.s32 %s49, 1
      %p53 = scmp.eq.s32.totalorder %s15, 1
      %p54 = scmp.ne.s32.totalorder %s49, %s51
      %p55 = scmp.eq.s32.totalorder %s15, 0
      %p56 = por %p54, %p55
      %p57 = scmp.ne.s32.totalorder %s49, %s51
      %p58 = scmp.eq.s32.totalorder %s20, 1
      %p59 = por %p57, %p58
      %p60 = scmp.ne.s32.totalorder %s51, %s52
      %p61 = scmp.eq.s32.totalorder %s20, 0
      %p62 = por %p60, %p61
      %p63 = scmp.ne.s32.totalorder %s51, %s52
      %p64 = scmp.eq.s32.totalorder %s21, 1
      %p65 = por %p63, %p64
      %p67 = scmp.ne.s32.totalorder %s52, %s66
      %p68 = scmp.eq.s32.totalorder %s21, 0
      %p69 = por %p67, %p68
      %s71 = sadd.s32 %s70, 1
      %p74 = scmp.eq.s32.totalorder %s15, 1
      %p75 = scmp.ne.s32.totalorder %s70, %s72
      %p76 = scmp.eq.s32.totalorder %s15, 0
      %p77 = por %p75, %p76
      %p78 = scmp.ne.s32.totalorder %s70, %s72
      %p79 = scmp.eq.s32.totalorder %s20, 1
      %p80 = por %p78, %p79
      %p81 = scmp.ne.s32.totalorder %s72, %s73
      %p82 = scmp.eq.s32.totalorder %s20, 0
      %p83 = por %p81, %p82
      %p84 = scmp.ne.s32.totalorder %s72, %s73
      %p85 = scmp.eq.s32.totalorder %s21, 1
      %p86 = por %p84, %p85
      %p88 = scmp.ne.s32.totalorder %s73, %s87
      %p89 = scmp.eq.s32.totalorder %s21, 0
      %p90 = por %p88, %p89
      %s91 = ssub.s32 %s15, %s22
      %p92 = scmp.eq.s32.totalorder %s91, 0
      %s94 = sadd.s32 %s93, 1
      %s95 = scalar_select %p92, %s93, %s94
      %p98 = pneg %p92
      %p99 = scmp.eq.s32.totalorder %s15, 1
      %p100 = por %p98, %p99
      %p101 = scmp.ne.s32.totalorder %s93, %s96
      %p102 = scmp.eq.s32.totalorder %s15, 0
      %p103 = por %p101, %p102
      %p104 = scmp.ne.s32.totalorder %s93, %s96
      %p105 = scmp.eq.s32.totalorder %s20, 1
      %p106 = por %p104, %p105
      %p107 = scmp.ne.s32.totalorder %s96, %s97
      %p108 = scmp.eq.s32.totalorder %s20, 0
      %p109 = por %p107, %p108
      %p110 = scmp.ne.s32.totalorder %s96, %s97
      %p111 = scmp.eq.s32.totalorder %s21, 1
      %p112 = por %p110, %p111
      %p114 = scmp.ne.s32.totalorder %s97, %s113
      %p115 = scmp.eq.s32.totalorder %s21, 0
      %p116 = por %p114, %p115
      %p117 = scmp.le.s32.totalorder 1, %s15
      %p118 = scmp.lt.s32.totalorder %s15, 3
      %p119 = pnand %p117, %p118
      %p120 = pneg %p119
      // Predicated region
      $region9: #{tpu_custom_call.1} parent=5 // pred_check
        _
      $region10: #{tpu_custom_call.1} parent=5 // pred_check_branch
        %122 = sbr.rel (%p119) target = $region12
      $region11: #{tpu_custom_call.1} parent=5 // pred_region
        %s123 = ssub.s32 %s15, 1
        // Predicated region
        $region13: #{tpu_custom_call.1} parent=11 // pred_check
          %p124 = pneg %p62
        $region14: #{tpu_custom_call.1} parent=11 // pred_check_branch
          %126 = sbr.rel (%p124) target = $region16
        $region15: #{tpu_custom_call.1} parent=11 // pred_region
          _
        $region16: #{tpu_custom_call.1} parent=11 // pred_fallthru
          _
        // Predicated region
        $region17: #{tpu_custom_call.1} parent=11 // pred_check
          %p127 = pneg %p83
        $region18: #{tpu_custom_call.1} parent=11 // pred_check_branch
          %129 = sbr.rel (%p127) target = $region20
        $region19: #{tpu_custom_call.1} parent=11 // pred_region
          _
        $region20: #{tpu_custom_call.1} parent=11 // pred_fallthru
          _
      $region12: #{tpu_custom_call.1} parent=5 // pred_fallthru
        _
      %p130 = scmp.lt.s32.totalorder %s15, 2
      // Predicated region
      $region21: #{tpu_custom_call.1} parent=5 // pred_check
        %p131 = pneg %p130
      $region22: #{tpu_custom_call.1} parent=5 // pred_check_branch
        %133 = sbr.rel (%p131) target = $region24
      $region23: #{tpu_custom_call.1} parent=5 // pred_region
        // Predicated region
        $region25: #{tpu_custom_call.1} parent=23 // pred_check
          %p134 = pneg %p35
        $region26: #{tpu_custom_call.1} parent=23 // pred_check_branch
          %136 = sbr.rel (%p134) target = $region28
        $region27: #{tpu_custom_call.1} parent=23 // pred_region
          %s137 = sand.u32 %s25, 1
          %s138 = scalar_lea.sflag [#allocation3], %s137
          %s139 = sand.u32 %s25, 1
          %s140 = smul.addr %s139, 8
          %s141 = scalar_lea.vmem [#allocation2], %s140
          %s142 = smul.u32 2, %s15
          %s144 = ssub.s32 128, 128
          %145 = vsyncadd %s138, %s144
          %s146 = smul.addr %s142, 64
          %s147 = scalar_lea.hbm %s0, %s146
          %s149 = sshll.u32 %s141, 4
          %s150 = int_to_ptr.vmem [resolvable:$true] %s149
          %152 = dma.hbm_to_vmem [thread:$0]  %s147, 128, %s150, %s138
        $region28: #{tpu_custom_call.1} parent=23 // pred_fallthru
          _
      $region24: #{tpu_custom_call.1} parent=5 // pred_fallthru
        _
      %p153 = scmp.le.s32.totalorder 1, %s15
      %p154 = scmp.lt.s32.totalorder %s15, 3
      %p155 = pnand %p153, %p154
      %p156 = pneg %p155
      // Predicated region
      $region29: #{tpu_custom_call.1} parent=5 // pred_check
        _
      $region30: #{tpu_custom_call.1} parent=5 // pred_check_branch
        %158 = sbr.rel (%p155) target = $region32
      $region31: #{tpu_custom_call.1} parent=5 // pred_region
        %s159 = ssub.s32 %s15, 1
        %s160 = sand.u32 %s28, 1
        %s161 = scalar_lea.sflag [#allocation3], %s160
        %s162 = sand.u32 %s28, 1
        %s163 = smul.addr %s162, 8
        %s164 = scalar_lea.vmem [#allocation2], %s163
        // Predicated region
        $region33: #{tpu_custom_call.1} parent=31 // pred_check
          %p165 = pneg %p41
        $region34: #{tpu_custom_call.1} parent=31 // pred_check_branch
          %167 = sbr.rel (%p165) target = $region36
        $region35: #{tpu_custom_call.1} parent=31 // pred_region
          %168 = dma.done %s161, 128
        $region36: #{tpu_custom_call.1} parent=31 // pred_fallthru
          _
        %s169 = sand.u32 %s28, 1
        %s170 = scalar_lea.sflag [#allocation3], %s169
        %s171 = sand.u32 %s28, 1
        %s172 = smul.addr %s171, 8
        %s173 = scalar_lea.vmem [#allocation2], %s172
        %p174 = pneg %p41
        %p175 = pneg %p38
        %p176 = pneg %p62
        %p177 = pneg %p59
        %p178 = pneg %p83
        %p179 = pneg %p80
        %p180 = pneg %p109
        %p181 = pneg %p106
        %s182 = sand.u32 %s96, 1
        %s183 = scalar_lea.sflag [#allocation4], %s182
        %s184 = sand.u32 %s96, 1
        %s185 = smul.addr %s184, 8
        %s186 = scalar_lea.vmem [#allocation5], %s185
        %s187 = smul.u32 2, %s20
        %s188 = smul.u32 2, %s20
        %v189 = vld [vmem:[%s1] sm:$0x7]
        %v190 = vld [vmem:[%s164] sm:$0xff]
        %v191 = vld [vmem:[%s2] sm:$0x7]
        %193 = vset.pattern.permute.xlu0 0
        %194 = vperm.xlu0 %193, %v191
        %v195 = vpop.permute.xlu0 %194
        %v198 = vcombine.high %v190, %v190
        %vm199 = vcmask 31744
        %v201 = vsel %vm199, %v189, 0
        %vm203 = vcmask 1043456
        %v204 = vsel %vm203, %v190, 0
        %v206 = vsel %vm203, %v198, 0
        %208 = vmatprep.subr.mxu0 0.0
        %209 = vmatpush1.msra.mxu0 0.0
        %210 = vmatprep.subr.mxu0 0.0
        %211 = vmatpush1.msra.mxu0 0.0
        %212 = vmatprep.subr.mxu0 0.0
        %213 = vmatpush1.msra.mxu0 0.0
        %214 = vmatprep.subr.mxu0 0.0
        %215 = vmatpush1.msra.mxu0 0.0
        %216 = vmatprep.subr.mxu0 0.0
        %217 = vmatpush1.msra.mxu0 0.0
        %218 = vmatprep.subr.mxu0 0.0
        %219 = vmatpush1.msra.mxu0 0.0
        %220 = vmatprep.subr.mxu0 0.0
        %221 = vmatpush1.msra.mxu0 0.0
        %222 = vmatprep.subr.mxu0 0.0
        %223 = vmatpush1.msra.mxu0 0.0
        %224 = vmatprep.subr.mxu0 0.0
        %225 = vmatpush1.msra.mxu0 0.0
        %226 = vmatprep.subr.mxu0 0.0
        %227 = vmatpush1.msra.mxu0 0.0
        %228 = vmatprep.subr.mxu0 0.0
        %229 = vmatpush1.msra.mxu0 0.0
        %230 = vmatprep.subr.mxu0 0.0
        %231 = vmatpush1.msra.mxu0 0.0
        %232 = vmatprep.subr.mxu0 0.0
        %233 = vmatpush1.msra.mxu0 0.0
        %234 = vmatprep.subr.mxu0 0.0
        %235 = vmatpush1.msra.mxu0 0.0
        %236 = vmatprep.subr.mxu0 0.0
        %237 = vmatpush1.msra.mxu0 0.0
        %238 = vmatprep.subr.mxu0 %v206
        %239 = vmatpush1.msra.mxu0 %v204
        %240 = vmatprep.subr.mxu0 0.0
        %241 = vmatpush2.msra.mxu0 0.0
        %242 = vmatprep.subr.mxu0 0.0
        %243 = vmatpush2.msra.mxu0 0.0
        %244 = vmatprep.subr.mxu0 0.0
        %245 = vmatpush2.msra.mxu0 0.0
        %246 = vmatprep.subr.mxu0 0.0
        %247 = vmatpush2.msra.mxu0 0.0
        %248 = vmatprep.subr.mxu0 0.0
        %249 = vmatpush2.msra.mxu0 0.0
        %250 = vmatprep.subr.mxu0 0.0
        %251 = vmatpush2.msra.mxu0 0.0
        %252 = vmatprep.subr.mxu0 0.0
        %253 = vmatpush2.msra.mxu0 0.0
        %254 = vmatprep.subr.mxu0 0.0
        %255 = vmatpush2.msra.mxu0 0.0
        %256 = vmatprep.subr.mxu0 0.0
        %257 = vmatpush2.msra.mxu0 0.0
        %258 = vmatprep.subr.mxu0 0.0
        %259 = vmatpush2.msra.mxu0 0.0
        %260 = vmatprep.subr.mxu0 0.0
        %261 = vmatpush2.msra.mxu0 0.0
        %262 = vmatprep.subr.mxu0 0.0
        %263 = vmatpush2.msra.mxu0 0.0
        %264 = vmatprep.subr.mxu0 0.0
        %265 = vmatpush2.msra.mxu0 0.0
        %266 = vmatprep.subr.mxu0 0.0
        %267 = vmatpush2.msra.mxu0 0.0
        %268 = vmatprep.subr.mxu0 0.0
        %269 = vmatpush2.msra.mxu0 0.0
        %270 = vmatprep.subr.mxu0 0.0
        %271 = vmatpush2.msra.mxu0 0.0
        %272 = vmatprep.mubr.f32.mxu0 0.0
        %273 = vmatmul.mubr.f32.gmra.mxu0 %v201
        %v274 = vpop.f32.mrf.mxu0
        %v275 = vadd.f32 %v195, %v274
        %v276 = vpop.f32.mrf.mxu0
        %v277 = vadd.f32 %v195, %v276
        %278 = vdwg.mxu0
        %v281 = vcombine.low %v275, %v277
        %283 = vst [vmem:[%s186] sm:$0x77] %v281
        %s284 = sand.u32 %s96, 1
        %s285 = scalar_lea.sflag [#allocation4], %s284
        %s286 = sand.u32 %s96, 1
        %s287 = smul.addr %s286, 8
        %s288 = scalar_lea.vmem [#allocation5], %s287
        // Predicated region
        $region37: #{tpu_custom_call.1} parent=31 // pred_check
          %p289 = pneg %p106
        $region38: #{tpu_custom_call.1} parent=31 // pred_check_branch
          %291 = sbr.rel (%p289) target = $region40
        $region39: #{tpu_custom_call.1} parent=31 // pred_region
          %s292 = smul.u32 2, %s20
          %s294 = ssub.s32 128, 128
          %295 = vsyncadd %s285, %s294
          %s296 = smul.addr %s292, 64
          %s297 = scalar_lea.hbm %s3, %s296
          %s299 = sshll.u32 %s288, 4
          %s300 = int_to_ptr.vmem [resolvable:$true] %s299
          %302 = dma.vmem_to_hbm [thread:$0]  %s300, 128, %s297, %s285
        $region40: #{tpu_custom_call.1} parent=31 // pred_fallthru
          _
      $region32: #{tpu_custom_call.1} parent=5 // pred_fallthru
        _
      %p303 = scmp.le.s32.totalorder 2, %s15
      // Predicated region
      $region41: #{tpu_custom_call.1} parent=5 // pred_check
        %p304 = pneg %p303
      $region42: #{tpu_custom_call.1} parent=5 // pred_check_branch
        %306 = sbr.rel (%p304) target = $region44
      $region43: #{tpu_custom_call.1} parent=5 // pred_region
        %s307 = ssub.s32 %s15, 2
        // Predicated region
        $region45: #{tpu_custom_call.1} parent=43 // pred_check
          %p308 = pneg %p112
        $region46: #{tpu_custom_call.1} parent=43 // pred_check_branch
          %310 = sbr.rel (%p308) target = $region48
        $region47: #{tpu_custom_call.1} parent=43 // pred_region
          %s311 = sand.u32 %s97, 1
          %s312 = scalar_lea.sflag [#allocation4], %s311
          %s313 = sand.u32 %s97, 1
          %s314 = smul.addr %s313, 8
          %s315 = scalar_lea.vmem [#allocation5], %s314
          %316 = dma.done %s312, 128
        $region48: #{tpu_custom_call.1} parent=43 // pred_fallthru
          _
      $region44: #{tpu_custom_call.1} parent=5 // pred_fallthru
        _
    $region6: #{tpu_custom_call.1} parent=1 // loop_footer
      %s19 = sadd.s32 1, %s15
    $region7: #{tpu_custom_call.1} parent=1 // loop_footer_branch
      %14 = sbr.rel target = $region3
    $region8: #{tpu_custom_call.1} parent=1 // loop_exit
      _
    %317 = vsyncpa [#allocation3], 1
    %s318 = scalar_lea.sflag [#allocation3], 1
    %319 = vsyncpa %s318, 1
    %320 = vsyncpa [#allocation4], 1
    %s321 = scalar_lea.sflag [#allocation4], 1
    %322 = vsyncpa %s321, 1

</llo_original>
